<compile_context>
chip_gen: v7x
topology: tpu7x:2x2x1
jax: 0.10.0
libtpu: 0.0.40
codegen_flags: <defaults>
</compile_context>

<pallas_src>
import functools

import jax
import jax.numpy as jnp
from jax import lax
from jax.experimental import pallas as pl
from jax.experimental.pallas import tpu as pltpu


# ---------------------------------------------------------------------------
# Pass 1: batch-mean reduction  x:(N, F) -> mean:(1, F)
# ---------------------------------------------------------------------------
def _mean_reduce_kernel(x_ref, mean_ref, acc_ref, *, inv_n, rows_grouped):
    n = pl.program_id(1)

    @pl.when(n == 0)
    def _init():
        acc_ref[...] = jnp.zeros_like(acc_ref)

    x = x_ref[...].astype(jnp.float32)
    if rows_grouped:
        # tile_n % 8 == 0: per-step partial sums land in 8 sublane rows with
        # pure VPU adds; the cross-sublane reduce is deferred to finalize.
        acc_ref[...] += x.reshape(-1, 8, x.shape[-1]).sum(axis=0)
    else:
        acc_ref[0:1, :] += jnp.sum(x, axis=0, keepdims=True)

    @pl.when(n == pl.num_programs(1) - 1)
    def _finalize():
        total = jnp.sum(acc_ref[...], axis=0, keepdims=True)      # (1, tile_f)
        mean_ref[...] = (total * inv_n).astype(mean_ref.dtype)    # true 1/N


# ---------------------------------------------------------------------------
# Pass 2: broadcast  mean:(1, F) -> y:(output_len, F)
# ---------------------------------------------------------------------------
def _broadcast_kernel(mean_ref, o_ref, *, rows_per_store):
    t_total, tf = o_ref.shape
    row = mean_ref[...]                                            # (1, tf)
    if t_total <= rows_per_store:
        o_ref[...] = jnp.broadcast_to(row, (t_total, tf))
    else:
        # Bounded broadcast chunk so the store epilogue never spills vregs.
        chunk = jnp.broadcast_to(row, (rows_per_store, tf))
        n_full = t_total // rows_per_store

        def body(i, carry):
            start = pl.multiple_of(i * rows_per_store, 8)
            o_ref[pl.ds(start, rows_per_store), :] = chunk
            return carry

        lax.fori_loop(0, n_full, body, 0)
        rem = t_total - n_full * rows_per_store
        if rem:
            o_ref[pl.ds(n_full * rows_per_store, rem), :] = chunk[:rem, :]


# ---------------------------------------------------------------------------
# Tiling / VMEM helpers
# ---------------------------------------------------------------------------
def _vmem_limits():
    """Per-generation scoped-VMEM limit and tiling budget (bytes)."""
    try:
        cap = int(pltpu.get_tpu_info().vmem_capacity_bytes)
    except Exception:
        cap = 64 * 1024 * 1024                     # conservative (v7x physical)
    limit = min(cap * 3 // 4, 96 * 1024 * 1024)    # v5e/v6e: 96 MiB, v7x: 48 MiB
    budget = limit * 2 // 3                        # headroom for internal scratch
    return limit, budget


def _pick_reduce_tiles(N, F, in_bytes, budget):
    """(tile_n, tile_f) for pass 1. tile_n divides N (dtype-aware sublane
    multiple); tile_f is a multiple of 128 (or full F when F < 128), capped so
    F >= 256 yields >= 2 feature tiles (v7x megacore sharding)."""
    sub = {4: 8, 2: 16, 1: 32}.get(in_bytes, 8)
    tn_cands = sorted((d for d in range(sub, N + 1, sub) if N % d == 0),
                      reverse=True) or [N]
    if F < 128:
        hi = F
    elif F < 256:
        hi = 128
    else:
        hi = max(128, (F // 2) // 128 * 128)

    fallback = (tn_cands[-1], F if F < 128 else 128)
    for tn in tn_cands:
        # input double buffer + (1,tile_f) output double buffer + f32 acc, per column
        per_col = (2 * tn + 2) * in_bytes + 8 * 4
        tf_max = budget // per_col
        if F < 128:
            if tf_max >= F:
                return tn, F
            continue
        tf = min(tf_max, hi) // 128 * 128
        if tf >= 128:
            return tn, tf
    return fallback


def _pick_broadcast_tiles(T, F, nbytes, budget):
    """(tile_t, tile_f, rows_per_store) for pass 2."""
    if F < 128:
        tf = F
    else:
        hi = 128 if F < 256 else max(128, (F // 2) // 128 * 128)
        lane_cap = max(128, (16384 // nbytes) // 128 * 128)   # <= 16 KiB per row
        tf = min(hi, lane_cap)
    row_bytes = max(1, tf * nbytes)

    # Output double buffer + tiny mean input double buffer within budget.
    tt_max = max(8, (budget - 2 * row_bytes) // (2 * row_bytes))
    tt = T if T <= tt_max else max(8, (tt_max // 8) * 8)

    # Guarantee >= 2 grid points when there is only one feature tile.
    n_f_tiles = -(-F // tf)
    if n_f_tiles < 2 and T >= 16:
        tt = min(tt, max(8, ((T + 1) // 2) // 8 * 8))

    # Broadcast/store chunk <= ~128 KiB of vregs (adaptive to tile width).
    rows_per_store = max(8, (131072 // row_bytes) // 8 * 8)
    return tt, tf, rows_per_store


# ---------------------------------------------------------------------------
# Wrapper: FXMean.forward
# ---------------------------------------------------------------------------
def fx_mean(x: jax.Array, output_len: int) -> jax.Array:
    """Pallas implementation of FXMean.forward: (N, D, L) -> (output_len, D, L)."""
    N, D, L = x.shape
    F = D * L
    x2 = x.reshape(N, F)                        # lane-dense flattened features
    nbytes = x.dtype.itemsize

    vmem_limit, budget = _vmem_limits()

    # -------- pass 1: mean over the batch axis --------
    tile_n, tile_f = _pick_reduce_tiles(N, F, nbytes, budget)
    rows_grouped = (tile_n % 8 == 0) and (tile_n >= 8)
    grid1 = (pl.cdiv(F, tile_f), N // tile_n)   # features parallel, batch last

    mean2 = pl.pallas_call(
        functools.partial(_mean_reduce_kernel, inv_n=1.0 / N,
                          rows_grouped=rows_grouped),
        out_shape=jax.ShapeDtypeStruct((1, F), x.dtype),
        grid_spec=pltpu.PrefetchScalarGridSpec(
            num_scalar_prefetch=0,
            grid=grid1,
            in_specs=[pl.BlockSpec((tile_n, tile_f), lambda f, n: (n, f))],
            out_specs=pl.BlockSpec((1, tile_f), lambda f, n: (0, f)),
            scratch_shapes=[pltpu.VMEM((8, tile_f), jnp.float32)],
        ),
        compiler_params=pltpu.CompilerParams(
            dimension_semantics=("parallel", "arbitrary"),
            vmem_limit_bytes=vmem_limit),
        cost_estimate=pl.CostEstimate(
            flops=N * F, transcendentals=0,
            bytes_accessed=(N * F + F) * nbytes),
    )(x2)

    # -------- pass 2: broadcast to output_len rows --------
    tile_t, tile_f2, rows_per_store = _pick_broadcast_tiles(
        output_len, F, nbytes, budget)
    grid2 = (pl.cdiv(output_len, tile_t), pl.cdiv(F, tile_f2))

    out2 = pl.pallas_call(
        functools.partial(_broadcast_kernel, rows_per_store=rows_per_store),
        out_shape=jax.ShapeDtypeStruct((output_len, F), x.dtype),
        grid_spec=pltpu.PrefetchScalarGridSpec(
            num_scalar_prefetch=0,
            grid=grid2,
            in_specs=[pl.BlockSpec((1, tile_f2), lambda t, f: (0, f))],
            out_specs=pl.BlockSpec((tile_t, tile_f2), lambda t, f: (t, f)),
        ),
        compiler_params=pltpu.CompilerParams(
            dimension_semantics=("parallel", "parallel"),
            vmem_limit_bytes=vmem_limit),
        cost_estimate=pl.CostEstimate(
            flops=0, transcendentals=0,
            bytes_accessed=(F + output_len * F) * nbytes),
    )(mean2)

    return out2.reshape(output_len, D, L)


if __name__ == "__main__":
    # Small shapes consistent with the module's forward: x is (N, D, L).
    N, D, L = 2, 4, 16
    output_len = 8

    key = jax.random.PRNGKey(0)
    x = jax.random.normal(key, (N, D, L), dtype=jnp.float32)

    y = jax.block_until_ready(fx_mean(x, output_len))

    # Reference (mirrors torch.mean(dim=0, keepdim=True) + expand).
    ref = jnp.broadcast_to(jnp.mean(x, axis=0, keepdims=True), (output_len, D, L))
    assert y.shape == (output_len, D, L), y.shape
    assert jnp.allclose(y, ref, atol=1e-6, rtol=1e-6), "mismatch vs reference"

    print("KERNEL_OK")
</pallas_src>

<mosaic_0001>
module attributes {stable_mosaic.version = 11 : i64} {
  func.func @_mean_reduce_kernel(%arg0: i32, %arg1: i32, %arg2: memref<2x64xf32, #tpu.memory_space<vmem>>, %arg3: memref<1x64xf32, #tpu.memory_space<vmem>>, %arg4: memref<8x64xf32, #tpu.memory_space<vmem>>) attributes {dimension_semantics = [#tpu.dimension_semantics<parallel>, #tpu.dimension_semantics<arbitrary>], iteration_bounds = array<i64: 1, 1>, scalar_prefetch = 0 : i64, scratch_operands = 1 : i64, tpu.core_type = #tpu.core_type<tc>, window_params = [{transform_indices = @transform_0, window_bounds = array<i64: 2, 64>}, {transform_indices = @transform_1, window_bounds = array<i64: 1, 64>}]} {
    %c0_i32 = arith.constant 0 : i32
    %0 = arith.cmpi eq, %arg1, %c0_i32 : i32
    %1 = arith.extui %0 : i1 to i32
    %c0_i32_0 = arith.constant 0 : i32
    %2 = arith.cmpi ne, %1, %c0_i32_0 : i32
    scf.if %2 {
      %cst_8 = arith.constant 0.000000e+00 : f32
      %12 = vector.broadcast %cst_8 : f32 to vector<8x64xf32>
      %c0_9 = arith.constant 0 : index
      %c0_10 = arith.constant 0 : index
      %13 = vector.load %arg4[%c0_9, %c0_10] : memref<8x64xf32, #tpu.memory_space<vmem>>, vector<8x64xf32>
      tpu.vector_store %arg4[%c0_9, %c0_10], %12 {strides = array<i32>} : memref<8x64xf32, #tpu.memory_space<vmem>>, vector<8x64xf32>,
    } else {
    }
    %c0 = arith.constant 0 : index
    %c0_1 = arith.constant 0 : index
    %3 = vector.load %arg2[%c0, %c0_1] : memref<2x64xf32, #tpu.memory_space<vmem>>, vector<2x64xf32>
    %c0_2 = arith.constant 0 : index
    %c0_3 = arith.constant 0 : index
    %4 = vector.load %arg4[%c0_2, %c0_3] : memref<8x64xf32, #tpu.memory_space<vmem>>, vector<1x64xf32>
    %cst = arith.constant dense<0.000000e+00> : vector<64xf32>
    %5 = vector.multi_reduction <add>, %3, %cst [0] : vector<2x64xf32> to vector<64xf32>
    %6 = vector.shape_cast %5 : vector<64xf32> to vector<1x64xf32>
    %7 = arith.addf %4, %6 : vector<1x64xf32>
    %c0_4 = arith.constant 0 : index
    %c0_5 = arith.constant 0 : index
    %8 = vector.load %arg4[%c0_4, %c0_5] : memref<8x64xf32, #tpu.memory_space<vmem>>, vector<1x64xf32>
    tpu.vector_store %arg4[%c0_4, %c0_5], %7 {strides = array<i32>} : memref<8x64xf32, #tpu.memory_space<vmem>>, vector<1x64xf32>,
    %c0_i32_6 = arith.constant 0 : i32
    %9 = arith.cmpi eq, %arg1, %c0_i32_6 : i32
    %10 = arith.extui %9 : i1 to i32
    %c0_i32_7 = arith.constant 0 : i32
    %11 = arith.cmpi ne, %10, %c0_i32_7 : i32
    scf.if %11 {
      %c0_8 = arith.constant 0 : index
      %c0_9 = arith.constant 0 : index
      %12 = vector.load %arg4[%c0_8, %c0_9] : memref<8x64xf32, #tpu.memory_space<vmem>>, vector<8x64xf32>
      %cst_10 = arith.constant dense<0.000000e+00> : vector<64xf32>
      %13 = vector.multi_reduction <add>, %12, %cst_10 [0] : vector<8x64xf32> to vector<64xf32>
      %14 = vector.shape_cast %13 : vector<64xf32> to vector<1x64xf32>
      %cst_11 = arith.constant 5.000000e-01 : f32
      %15 = vector.broadcast %cst_11 : f32 to vector<1x64xf32>
      %16 = arith.mulf %14, %15 : vector<1x64xf32>
      %c0_12 = arith.constant 0 : index
      %c0_13 = arith.constant 0 : index
      %17 = vector.load %arg3[%c0_12, %c0_13] : memref<1x64xf32, #tpu.memory_space<vmem>>, vector<1x64xf32>
      tpu.vector_store %arg3[%c0_12, %c0_13], %16 {strides = array<i32>} : memref<1x64xf32, #tpu.memory_space<vmem>>, vector<1x64xf32>,
    } else {
    }
    return
  }
  func.func @transform_0(%arg0: i32, %arg1: i32) -> (i32, i32) {
    %c0_i32 = arith.constant 0 : i32
    return %arg1, %arg0 : i32, i32
  }
  func.func @transform_1(%arg0: i32, %arg1: i32) -> (i32, i32) {
    %c0_i32 = arith.constant 0 : i32
    %c0_i32_0 = arith.constant 0 : i32
    return %c0_i32, %arg0 : i32, i32
  }
}

</mosaic_0001>

<llo_original>
// kernel: tpu_custom_call.1
$region0: #{tpu_custom_call.1}
  #allocation0 [shape = 'u32[]', space=smem, size = 0x4, offset = 0x4, fixed_abs, tag = 'smem constant byte address 0x4 - core index']
  #allocation1 [shape = 'u32[144,128]{1,0:T(1,128)}', space=vmem, size = 0x12000, scoped, tag = 'internal scratch']
  #allocation2 [shape = 'f32[8,64]{1,0:T(8,128)}', space=vmem, size = 0x1000, scoped, tag = 'scratch operand']
  %s0 = inlined_call_operand.hbm [shape: f32[2,64], index: 0, kind: input, shape index: {}]
  %s1 = inlined_call_operand.hbm [shape: f32[1,64], index: 1, kind: output, shape index: {}]
  %s2 = sld [smem:[#allocation0]]
  $region26: #{tpu_custom_call.1} parent=0
    _
  %s4 = ssub.s32 1, %s2
  %s5 = scalar_select 0, %s4, %s2
  $region1: #{tpu_custom_call.1} parent=0
    #allocation3 [shape = 'u8[1024]{0}', space=vmem, size = 0x400, scoped, tag = 'input window, operand 0, single buffered']
    #allocation4 [shape = 's32[1]{0}', space=sflag, size = 0x4, scoped, tag = 'scoped memory for tpu_custom_call.1']
    #allocation5 [shape = 's32[1]{0}', space=sflag, size = 0x4, scoped, tag = 'scoped memory for tpu_custom_call.1']
    #allocation6 [shape = 'u8[512]{0}', space=vmem, size = 0x400, scoped, tag = 'output window, operand 0, single buffered']
    %6 = vsyncpa [#allocation4], 0
    %7 = vsyncpa [#allocation5], 0
    // Predicated region
    $region2: #{tpu_custom_call.1} parent=1 // pred_check
      _
    $region3: #{tpu_custom_call.1} parent=1 // pred_check_branch
      %9 = sbr.rel (0) target = $region5
    $region4: #{tpu_custom_call.1} parent=1 // pred_region
      %s11 = ssub.s32 32, 32
      %12 = vsyncadd [#allocation4], %s11
      %s14 = sshll.u32 [#allocation3], 4
      %s15 = int_to_ptr.vmem [resolvable:$true] %s14
      %17 = dma.hbm_to_vmem [thread:$0]  %s0, 32, %s15, [#allocation4]
    $region5: #{tpu_custom_call.1} parent=1 // pred_fallthru
      _
    // Predicated region
    $region6: #{tpu_custom_call.1} parent=1 // pred_check
      _
    $region7: #{tpu_custom_call.1} parent=1 // pred_check_branch
      %19 = sbr.rel (0) target = $region9
    $region8: #{tpu_custom_call.1} parent=1 // pred_region
      %20 = dma.done [#allocation4], 32
    $region9: #{tpu_custom_call.1} parent=1 // pred_fallthru
      _
    %p21 = scmp.eq.s32.totalorder 0, 0
    // Predicated region
    $region10: #{tpu_custom_call.1} parent=1 // pred_check
      %p22 = pneg %p21
    $region11: #{tpu_custom_call.1} parent=1 // pred_check_branch
      %24 = sbr.rel (%p22) target = $region13
    $region12: #{tpu_custom_call.1} parent=1 // pred_region
      %vm25 = vcmask 523264
      %26 = vst.msk [vmem:[#allocation2] sm:$0xff] %vm25, 0.0
    $region13: #{tpu_custom_call.1} parent=1 // pred_fallthru
      _
    %v27 = vld [vmem:[#allocation3] sm:$0x3]
    %v28 = vld [vmem:[#allocation2] sm:$0x1]
    %vm29 = vcmask 517120
    %v30 = vsel %vm29, %v27, 0.0
    %v31 = vrot.slane %v30, 4
    %v32 = vadd.f32 %v30, %v31
    %v33 = vrot.slane %v32, 2
    %v34 = vadd.f32 %v32, %v33
    %v35 = vrot.slane %v34, 1
    %v36 = vadd.f32 %v34, %v35
    %v37 = vadd.f32 %v28, %v36
    %vm38 = vcmask 516096
    %39 = vst.msk [vmem:[#allocation2] sm:$0x1] %vm38, %v37
    // Predicated region
    $region14: #{tpu_custom_call.1} parent=1 // pred_check
      %p40 = pneg %p21
    $region15: #{tpu_custom_call.1} parent=1 // pred_check_branch
      %42 = sbr.rel (%p40) target = $region17
    $region16: #{tpu_custom_call.1} parent=1 // pred_region
      %v43 = vld [vmem:[#allocation2] sm:$0xff]
      %vm44 = vcmask 523264
      %v45 = vsel %vm44, %v43, 0.0
      %v46 = vrot.slane %v45, 4
      %v47 = vadd.f32 %v45, %v46
      %v48 = vrot.slane %v47, 2
      %v49 = vadd.f32 %v47, %v48
      %v50 = vrot.slane %v49, 1
      %v51 = vadd.f32 %v49, %v50
      %v52 = vmul.f32 %v51, 0.5
      %53 = vst.msk [vmem:[#allocation6] sm:$0x1] %vm38, %v52
    $region17: #{tpu_custom_call.1} parent=1 // pred_fallthru
      _
    // Predicated region
    $region18: #{tpu_custom_call.1} parent=1 // pred_check
      _
    $region19: #{tpu_custom_call.1} parent=1 // pred_check_branch
      %55 = sbr.rel (0) target = $region21
    $region20: #{tpu_custom_call.1} parent=1 // pred_region
      %s57 = ssub.s32 16, 16
      %58 = vsyncadd [#allocation5], %s57
      %s60 = sshll.u32 [#allocation6], 4
      %s61 = int_to_ptr.vmem [resolvable:$true] %s60
      %63 = dma.vmem_to_hbm [thread:$0]  %s61, 16, %s1, [#allocation5]
    $region21: #{tpu_custom_call.1} parent=1 // pred_fallthru
      _
    // Predicated region
    $region22: #{tpu_custom_call.1} parent=1 // pred_check
      _
    $region23: #{tpu_custom_call.1} parent=1 // pred_check_branch
      %65 = sbr.rel (0) target = $region25
    $region24: #{tpu_custom_call.1} parent=1 // pred_region
      %66 = dma.done [#allocation5], 16
    $region25: #{tpu_custom_call.1} parent=1 // pred_fallthru
      _
    %67 = vsyncpa [#allocation4], 1
    %68 = vsyncpa [#allocation5], 1

</llo_original>
